<compile_context>
chip_gen: v7x
topology: tpu7x:2x2x1
jax: 0.10.0
libtpu: 0.0.40
codegen_flags: <defaults>
</compile_context>

<pallas_src>
import jax
import jax.numpy as jnp
import numpy as np
from jax.experimental import pallas as pl
from jax.experimental.pallas import tpu as pltpu

n_embd = 32
text = "hello pallas tpu bigram language model!"
chars = sorted(list(set(text)))
vocab_size = len(chars)

LANE = 128
NEG_INF = -1e30              # finite lane padding: safe under max/exp/0*x
VMEM_LIMIT = 8 * 1024 * 1024


def _round_up(x, m):
    return (x + m - 1) // m * m


def _pick_row_tile(n):
    """Largest row tile (multiple of 8, up to 1024) that evenly divides n and
    leaves a grid of >= 2 steps; otherwise one full-n tile."""
    for t in (1024, 512, 256, 128, 64, 32, 16, 8):
        if n >= 2 * t and n % t == 0:
            return t
    return n


# ---------------------------------------------------------------------------
# Kernels
# ---------------------------------------------------------------------------
def _onehot_logits(idx_blk, fused):
    """Gather rows of `fused` via one MXU matmul.

    idx_blk: (tn, 1) int32      fused: (K=128k, Vp) f32
    returns: (tn, Vp) f32 = fused[idx]  (exact: one-hot is exactly 0/1)
    """
    tn = idx_blk.shape[0]
    k = fused.shape[0]
    lane = jax.lax.broadcasted_iota(jnp.int32, (tn, k), 1)
    onehot = (lane == idx_blk).astype(jnp.float32)
    return jnp.dot(onehot, fused, preferred_element_type=jnp.float32)


def bigram_logits_kernel(idx_ref, fused_ref, logits_ref):
    logits_ref[...] = _onehot_logits(idx_ref[...], fused_ref[...])


def bigram_logits_loss_kernel(idx_ref, tgt_ref, fused_ref, logits_ref, loss_ref):
    logits = _onehot_logits(idx_ref[...], fused_ref[...])     # (tn, Vp)
    logits_ref[...] = logits                                  # lane-dense store

    tn, vp = logits.shape
    lane = jax.lax.broadcasted_iota(jnp.int32, (tn, vp), 1)
    tgt_onehot = (lane == tgt_ref[...]).astype(jnp.float32)   # single VPU compare

    # Cross entropy over the lane-padded tile (padded lanes are NEG_INF).
    m = jnp.max(logits, axis=-1, keepdims=True)
    lse = m + jnp.log(jnp.sum(jnp.exp(logits - m), axis=-1, keepdims=True))
    picked = jnp.sum(tgt_onehot * logits, axis=-1, keepdims=True)
    loss_ref[...] = lse - picked                              # per-token loss (tn, 1)


# ---------------------------------------------------------------------------
# Wrapper
# ---------------------------------------------------------------------------
def _fused_table(params):
    """Fold Embedding(V, C) and Linear(C, V) into one padded logits table.

    logits[i] == fused[idx[i]] exactly (bigram model).  K-rows padded to 128
    with zeros (contracted against zero one-hot entries), lanes padded to a
    multiple of 128 with NEG_INF (so softmax/CE over the padded tile is exact).
    In practice this folding is done once at init / cached.
    """
    table, w, b = params
    V = table.shape[0]
    fused = (table @ w + b[None, :]).astype(jnp.float32)      # (V, V)
    k_rows = _round_up(V, LANE)                               # K = 128 for the MXU
    v_lanes = _round_up(V, LANE)
    out = jnp.zeros((k_rows, v_lanes), jnp.float32)
    out = out.at[:V, :V].set(fused)
    out = out.at[:V, V:].set(NEG_INF)
    return out


def bigram_forward(idx, params, targets=None, pad_lanes=False):
    """Mirrors BigramLanguageModel.forward.

    Returns (logits(B,T,V), None) when targets is None, otherwise
    (logits(B*T,V), scalar loss).  With pad_lanes=True the logits keep their
    128-lane padding (lanes >= V hold -1e30), skipping one full HBM pass.
    """
    table, _, _ = params
    B, T = idx.shape
    N = B * T
    V = table.shape[0]

    fused = _fused_table(params)
    k_rows, v_lanes = fused.shape

    tn = _pick_row_tile(N)
    grid = (N // tn,)
    idx2d = idx.reshape(N, 1).astype(jnp.int32)

    fused_spec = pl.BlockSpec((k_rows, v_lanes), lambda i: (0, 0))   # resident
    tok_spec = pl.BlockSpec((tn, 1), lambda i: (i, 0))               # idx / targets
    logits_spec = pl.BlockSpec((tn, v_lanes), lambda i: (i, 0))

    cparams = pltpu.CompilerParams(
        dimension_semantics=("parallel",),      # no shared output block -> v7x 2-TC friendly
        vmem_limit_bytes=VMEM_LIMIT,
    )

    if targets is None:
        logits_pad = pl.pallas_call(
            bigram_logits_kernel,
            out_shape=jax.ShapeDtypeStruct((N, v_lanes), jnp.float32),
            grid=grid,
            in_specs=[tok_spec, fused_spec],
            out_specs=logits_spec,
            compiler_params=cparams,
        )(idx2d, fused)
        logits = logits_pad if pad_lanes else logits_pad[:, :V]
        return logits.reshape(B, T, -1), None

    tgt2d = targets.reshape(N, 1).astype(jnp.int32)
    loss_spec = pl.BlockSpec((tn, 1), lambda i: (i, 0))

    logits_pad, per_tok = pl.pallas_call(
        bigram_logits_loss_kernel,
        out_shape=(jax.ShapeDtypeStruct((N, v_lanes), jnp.float32),
                   jax.ShapeDtypeStruct((N, 1), jnp.float32)),
        grid=grid,
        in_specs=[tok_spec, tok_spec, fused_spec],
        out_specs=(logits_spec, loss_spec),
        compiler_params=cparams,
    )(idx2d, tgt2d, fused)

    loss = jnp.mean(per_tok)                     # tiny follow-up reduce (N floats)
    logits = logits_pad if pad_lanes else logits_pad[:, :V]
    return logits, loss


def init_params(key):
    k1, k2, k3 = jax.random.split(key, 3)
    table = jax.random.normal(k1, (vocab_size, n_embd), jnp.float32)
    # nn.Linear(n_embd, vocab_size): torch stores weight (V, C), used as x @ W.T.
    # We keep it pre-transposed as (C, V).
    w = jax.random.normal(k2, (n_embd, vocab_size), jnp.float32) * (1.0 / np.sqrt(n_embd))
    b = jax.random.normal(k3, (vocab_size,), jnp.float32) * 0.01
    return table, w, b


def _reference(idx, params, targets):
    table, w, b = params
    B, T = idx.shape
    emb = table[idx]                                   # (B, T, C)
    logits = emb @ w + b                               # (B, T, V)
    logits = logits.reshape(B * T, vocab_size)
    tgt = targets.reshape(B * T)
    lse = jax.scipy.special.logsumexp(logits, axis=-1)
    picked = jnp.take_along_axis(logits, tgt[:, None], axis=-1)[:, 0]
    loss = jnp.mean(lse - picked)
    return logits, loss


if __name__ == "__main__":
    key = jax.random.PRNGKey(0)
    pkey, ikey, tkey = jax.random.split(key, 3)

    params = init_params(pkey)

    B, T = 2, 8
    idx = jax.random.randint(ikey, (B, T), 0, vocab_size, dtype=jnp.int32)
    targets = jax.random.randint(tkey, (B, T), 0, vocab_size, dtype=jnp.int32)

    # Path 1: no targets -> (B, T, V) logits, loss None
    logits_bt, loss_none = bigram_forward(idx, params, targets=None)
    jax.block_until_ready(logits_bt)
    assert loss_none is None
    assert logits_bt.shape == (B, T, vocab_size)

    # Path 2: with targets -> (B*T, V) logits + scalar cross-entropy loss
    logits, loss = bigram_forward(idx, params, targets=targets)
    jax.block_until_ready((logits, loss))
    assert logits.shape == (B * T, vocab_size)

    # Cross-check against a pure-JAX reference.
    ref_logits, ref_loss = _reference(idx, params, targets)
    np.testing.assert_allclose(np.asarray(logits_bt).reshape(B * T, vocab_size),
                               np.asarray(ref_logits), atol=1e-4, rtol=1e-4)
    np.testing.assert_allclose(np.asarray(logits), np.asarray(ref_logits),
                               atol=1e-4, rtol=1e-4)
    np.testing.assert_allclose(np.asarray(loss), np.asarray(ref_loss),
                               atol=1e-4, rtol=1e-4)

    print("KERNEL_OK")
</pallas_src>

<mosaic_0001>
module attributes {stable_mosaic.version = 11 : i64} {
  func.func @bigram_logits_kernel(%arg0: i32, %arg1: memref<8x1xi32, #tpu.memory_space<vmem>>, %arg2: memref<128x128xf32, #tpu.memory_space<vmem>>, %arg3: memref<8x128xf32, #tpu.memory_space<vmem>>) attributes {dimension_semantics = [#tpu.dimension_semantics<parallel>], iteration_bounds = array<i64: 2>, scalar_prefetch = 0 : i64, scratch_operands = 0 : i64, tpu.core_type = #tpu.core_type<tc>, window_params = [{transform_indices = @transform_0, window_bounds = array<i64: 8, 1>}, {pipeline_mode = #tpu.pipeline_mode<synchronous>, transform_indices = @transform_1, window_bounds = array<i64: 128, 128>}, {transform_indices = @transform_2, window_bounds = array<i64: 8, 128>}]} {
    %c0 = arith.constant 0 : index
    %c0_0 = arith.constant 0 : index
    %0 = vector.load %arg1[%c0, %c0_0] : memref<8x1xi32, #tpu.memory_space<vmem>>, vector<8x1xi32>
    %c0_1 = arith.constant 0 : index
    %c0_2 = arith.constant 0 : index
    %1 = vector.load %arg2[%c0_1, %c0_2] : memref<128x128xf32, #tpu.memory_space<vmem>>, vector<128x128xf32>
    %2 = tpu.iota {dimensions = array<i32: 1>} : vector<8x128xi32>
    %3 = vector.broadcast %0 : vector<8x1xi32> to vector<8x128xi32>
    %4 = arith.cmpi eq, %2, %3 : vector<8x128xi32>
    %5 = arith.extui %4 : vector<8x128xi1> to vector<8x128xi32>
    %6 = arith.sitofp %5 : vector<8x128xi32> to vector<8x128xf32>
    %cst = arith.constant dense<0.000000e+00> : vector<8x128xf32>
    %7 = tpu.matmul %6, %1, %cst {dimension_numbers = #tpu.dot_dimension_numbers<[1], [0], [0], [1], [0, 0, 1, 1], [], []>} : vector<8x128xf32>, vector<128x128xf32>, vector<8x128xf32> -> vector<8x128xf32>
    %c0_3 = arith.constant 0 : index
    %c0_4 = arith.constant 0 : index
    %8 = vector.load %arg3[%c0_3, %c0_4] : memref<8x128xf32, #tpu.memory_space<vmem>>, vector<8x128xf32>
    tpu.vector_store %arg3[%c0_3, %c0_4], %7 {strides = array<i32>} : memref<8x128xf32, #tpu.memory_space<vmem>>, vector<8x128xf32>,
    return
  }
  func.func @transform_0(%arg0: i32) -> (i32, i32) {
    %c0_i32 = arith.constant 0 : i32
    %c0_i32_0 = arith.constant 0 : i32
    return %arg0, %c0_i32 : i32, i32
  }
  func.func @transform_1(%arg0: i32) -> (i32, i32) {
    %c0_i32 = arith.constant 0 : i32
    %c0_i32_0 = arith.constant 0 : i32
    %c0_i32_1 = arith.constant 0 : i32
    return %c0_i32, %c0_i32_0 : i32, i32
  }
  func.func @transform_2(%arg0: i32) -> (i32, i32) {
    %c0_i32 = arith.constant 0 : i32
    %c0_i32_0 = arith.constant 0 : i32
    return %arg0, %c0_i32 : i32, i32
  }
}

</mosaic_0001>

<llo_original>
// kernel: tpu_custom_call.1
$region0: #{tpu_custom_call.1}
  #allocation0 [shape = 'u32[]', space=smem, size = 0x4, offset = 0x4, fixed_abs, tag = 'smem constant byte address 0x4 - core index']
  #allocation1 [shape = 'u32[144,128]{1,0:T(1,128)}', space=vmem, size = 0x12000, scoped, tag = 'internal scratch']
  %s0 = inlined_call_operand.vmem [shape: s32[16,1], index: 0, kind: input, shape index: {}]
  %s1 = inlined_call_operand.hbm [shape: f32[128,128], index: 1, kind: input, shape index: {}]
  %s2 = inlined_call_operand.hbm [shape: f32[16,128], index: 2, kind: output, shape index: {}]
  %s3 = sld [smem:[#allocation0]]
  $region45: #{tpu_custom_call.1} parent=0
    _
  %s5 = ssub.s32 1, %s3
  %s6 = scalar_select 0, %s5, %s3
  $region1: #{tpu_custom_call.1} parent=0
    #allocation2 [shape = 'u8[65536]{0}', space=vmem, size = 0x10000, scoped, tag = 'input window, operand 1, single buffered']
    #allocation3 [shape = 's32[2]{0}', space=sflag, size = 0x8, scoped, tag = 'scoped memory for tpu_custom_call.1']
    #allocation4 [shape = 's32[2]{0}', space=sflag, size = 0x8, scoped, tag = 'scoped memory for tpu_custom_call.1']
    #allocation5 [shape = 'u8[8192]{0}', space=vmem, size = 0x2000, scoped, tag = 'output window, operand 0']
    %7 = vsyncpa [#allocation3], 0
    %8 = vsyncpa [#allocation4], 0
    %s9 = scalar_lea.sflag [#allocation4], 1
    %10 = vsyncpa %s9, 0
    loop: start=0, step=1, limit=4
    $region2: #{tpu_custom_call.1} parent=1 // loop_pre_header
      _
    $region3: #{tpu_custom_call.1} parent=1 // loop_header
      %s12 = sphi 0, %s16
      %p13 = scmp.ge.s32.totalorder %s12, 4
      %s22 = sphi 0, %s24
      %s25 = sphi 0, %s22
      %s26 = sphi 0, %s25
      %s42 = sphi 0, %s26
      %s46 = sphi 0, %s46
      %s48 = sphi 0, %s46
      %s49 = sphi 0, %s48
      %s63 = sphi 0, %s49
      %s69 = sphi 0, %s71
      %s72 = sphi 0, %s69
      %s73 = sphi 0, %s72
      %s89 = sphi 0, %s73
    $region4: #{tpu_custom_call.1} parent=1 // loop_header_branch
      %15 = sbr.rel (%p13) target = $region8
    $region5: #{tpu_custom_call.1} parent=1 // loop_body
      %s17 = ssub.s32 %s12, 1
      %s18 = ssub.s32 %s12, 2
      %s19 = sadd.s32 %s12, 1
      %s20 = ssub.s32 %s12, %s19
      %p21 = scmp.eq.s32.totalorder %s20, 0
      %s23 = sadd.s32 %s22, 1
      %s24 = scalar_select %p21, %s22, %s23
      %p27 = pneg %p21
      %p28 = scmp.eq.s32.totalorder %s12, 1
      %p29 = por %p27, %p28
      %p30 = scmp.ne.s32.totalorder %s22, %s25
      %p31 = scmp.eq.s32.totalorder %s12, 0
      %p32 = por %p30, %p31
      %p33 = scmp.ne.s32.totalorder %s22, %s25
      %p34 = scmp.eq.s32.totalorder %s17, 1
      %p35 = por %p33, %p34
      %p36 = scmp.ne.s32.totalorder %s25, %s26
      %p37 = scmp.eq.s32.totalorder %s17, 0
      %p38 = por %p36, %p37
      %p39 = scmp.ne.s32.totalorder %s25, %s26
      %p40 = scmp.eq.s32.totalorder %s18, 1
      %p41 = por %p39, %p40
      %p43 = scmp.ne.s32.totalorder %s26, %s42
      %p44 = scmp.eq.s32.totalorder %s18, 0
      %p45 = por %p43, %p44
      %s47 = sadd.s32 %s46, 1
      %p50 = scmp.eq.s32.totalorder %s12, 1
      %p51 = scmp.ne.s32.totalorder %s46, %s48
      %p52 = scmp.eq.s32.totalorder %s12, 0
      %p53 = por %p51, %p52
      %p54 = scmp.ne.s32.totalorder %s46, %s48
      %p55 = scmp.eq.s32.totalorder %s17, 1
      %p56 = por %p54, %p55
      %p57 = scmp.ne.s32.totalorder %s48, %s49
      %p58 = scmp.eq.s32.totalorder %s17, 0
      %p59 = por %p57, %p58
      %p60 = scmp.ne.s32.totalorder %s48, %s49
      %p61 = scmp.eq.s32.totalorder %s18, 1
      %p62 = por %p60, %p61
      %p64 = scmp.ne.s32.totalorder %s49, %s63
      %p65 = scmp.eq.s32.totalorder %s18, 0
      %p66 = por %p64, %p65
      %s67 = ssub.s32 %s12, %s19
      %p68 = scmp.eq.s32.totalorder %s67, 0
      %s70 = sadd.s32 %s69, 1
      %s71 = scalar_select %p68, %s69, %s70
      %p74 = pneg %p68
      %p75 = scmp.eq.s32.totalorder %s12, 1
      %p76 = por %p74, %p75
      %p77 = scmp.ne.s32.totalorder %s69, %s72
      %p78 = scmp.eq.s32.totalorder %s12, 0
      %p79 = por %p77, %p78
      %p80 = scmp.ne.s32.totalorder %s69, %s72
      %p81 = scmp.eq.s32.totalorder %s17, 1
      %p82 = por %p80, %p81
      %p83 = scmp.ne.s32.totalorder %s72, %s73
      %p84 = scmp.eq.s32.totalorder %s17, 0
      %p85 = por %p83, %p84
      %p86 = scmp.ne.s32.totalorder %s72, %s73
      %p87 = scmp.eq.s32.totalorder %s18, 1
      %p88 = por %p86, %p87
      %p90 = scmp.ne.s32.totalorder %s73, %s89
      %p91 = scmp.eq.s32.totalorder %s18, 0
      %p92 = por %p90, %p91
      %p93 = scmp.le.s32.totalorder 1, %s12
      %p94 = scmp.lt.s32.totalorder %s12, 3
      %p95 = pnand %p93, %p94
      %p96 = pneg %p95
      // Predicated region
      $region9: #{tpu_custom_call.1} parent=5 // pred_check
        _
      $region10: #{tpu_custom_call.1} parent=5 // pred_check_branch
        %98 = sbr.rel (%p95) target = $region12
      $region11: #{tpu_custom_call.1} parent=5 // pred_region
        %s99 = ssub.s32 %s12, 1
        // Predicated region
        $region13: #{tpu_custom_call.1} parent=11 // pred_check
          %p100 = pneg %p59
        $region14: #{tpu_custom_call.1} parent=11 // pred_check_branch
          %102 = sbr.rel (%p100) target = $region16
        $region15: #{tpu_custom_call.1} parent=11 // pred_region
          %s104 = ssub.s32 2048, 2048
          %105 = vsyncadd [#allocation3], %s104
          %s106 = sshll.u32 [#allocation2], 4
          %s107 = int_to_ptr.vmem [resolvable:$true] %s106
          %112 = dma.hbm_to_vmem [thread:$0]  %s1, 2048, %s107, [#allocation3], 128, 128, 8
        $region16: #{tpu_custom_call.1} parent=11 // pred_fallthru
          _
      $region12: #{tpu_custom_call.1} parent=5 // pred_fallthru
        _
      %p113 = scmp.lt.s32.totalorder %s12, 2
      // Predicated region
      $region17: #{tpu_custom_call.1} parent=5 // pred_check
        %p114 = pneg %p113
      $region18: #{tpu_custom_call.1} parent=5 // pred_check_branch
        %116 = sbr.rel (%p114) target = $region20
      $region19: #{tpu_custom_call.1} parent=5 // pred_region
        // Predicated region
        $region21: #{tpu_custom_call.1} parent=19 // pred_check
          %p117 = pneg %p32
        $region22: #{tpu_custom_call.1} parent=19 // pred_check_branch
          %119 = sbr.rel (%p117) target = $region24
        $region23: #{tpu_custom_call.1} parent=19 // pred_region
          %p120 = scmp.lt.s32.totalorder %s12, 1
          %s121 = scalar_select %p120, %s12, 1
          %s122 = smul.addr %s121, 8
          %s123 = scalar_lea.vmem %s0, %s122
        $region24: #{tpu_custom_call.1} parent=19 // pred_fallthru
          _
      $region20: #{tpu_custom_call.1} parent=5 // pred_fallthru
        _
      %p124 = scmp.le.s32.totalorder 1, %s12
      %p125 = scmp.lt.s32.totalorder %s12, 3
      %p126 = pnand %p124, %p125
      %p127 = pneg %p126
      // Predicated region
      $region25: #{tpu_custom_call.1} parent=5 // pred_check
        _
      $region26: #{tpu_custom_call.1} parent=5 // pred_check_branch
        %129 = sbr.rel (%p126) target = $region28
      $region27: #{tpu_custom_call.1} parent=5 // pred_region
        %s130 = ssub.s32 %s12, 1
        // Predicated region
        $region29: #{tpu_custom_call.1} parent=27 // pred_check
          %p131 = pneg %p59
        $region30: #{tpu_custom_call.1} parent=27 // pred_check_branch
          %133 = sbr.rel (%p131) target = $region32
        $region31: #{tpu_custom_call.1} parent=27 // pred_region
          %134 = dma.done [#allocation3], 2048
        $region32: #{tpu_custom_call.1} parent=27 // pred_fallthru
          _
        %p135 = scmp.lt.s32.totalorder %s17, 1
        %s136 = scalar_select %p135, %s17, 1
        %s137 = smul.addr %s136, 8
        %s138 = scalar_lea.vmem %s0, %s137
        %p139 = pneg %p38
        %p140 = pneg %p35
        %p141 = pneg %p59
        %p142 = pneg %p56
        %p143 = pneg %p85
        %p144 = pneg %p82
        %s145 = sand.u32 %s72, 1
        %s146 = scalar_lea.sflag [#allocation4], %s145
        %s147 = sand.u32 %s72, 1
        %s148 = smul.addr %s147, 8
        %s149 = scalar_lea.vmem [#allocation5], %s148
        %p150 = scmp.lt.s32.totalorder %s17, 1
        %s151 = scalar_select %p150, %s17, 1
        %s152 = smul.addr %s151, 8
        %s153 = scalar_lea.vmem %s0, %s152
        %v154 = vld [vmem:[%s153] sm:$0xff]
        %v155 = vld [vmem:[#allocation2] sm:$0xff]
        %v156 = vld [vmem:[#allocation2 + $0x8] sm:$0xff]
        %v157 = vld [vmem:[#allocation2 + $0x10] sm:$0xff]
        %v158 = vld [vmem:[#allocation2 + $0x18] sm:$0xff]
        %v159 = vld [vmem:[#allocation2 + $0x20] sm:$0xff]
        %v160 = vld [vmem:[#allocation2 + $0x28] sm:$0xff]
        %v161 = vld [vmem:[#allocation2 + $0x30] sm:$0xff]
        %v162 = vld [vmem:[#allocation2 + $0x38] sm:$0xff]
        %v163 = vld [vmem:[#allocation2 + $0x40] sm:$0xff]
        %v164 = vld [vmem:[#allocation2 + $0x48] sm:$0xff]
        %v165 = vld [vmem:[#allocation2 + $0x50] sm:$0xff]
        %v166 = vld [vmem:[#allocation2 + $0x58] sm:$0xff]
        %v167 = vld [vmem:[#allocation2 + $0x60] sm:$0xff]
        %v168 = vld [vmem:[#allocation2 + $0x68] sm:$0xff]
        %v169 = vld [vmem:[#allocation2 + $0x70] sm:$0xff]
        %v170 = vld [vmem:[#allocation2 + $0x78] sm:$0xff]
        %v171 = vlaneseq
        %v172 = vand.u32 %v171, 127
        %173 = vset.pattern.permute.xlu0 0
        %174 = vperm.xlu0 %173, %v154
        %v175 = vpop.permute.xlu0 %174
        %vm176 = vcmp.eq.s32.totalorder %v172, %v175
        %v177 = vsel %vm176, 1, 0
        %v178 = vcvt.s32.f32 %v177
        %179 = vmatprep.subr.mxu0 0.0
        %180 = vmatpush1.msra.mxu0 %v155
        %181 = vmatprep.subr.mxu0 0.0
        %182 = vmatpush1.msra.mxu0 %v156
        %183 = vmatprep.subr.mxu0 0.0
        %184 = vmatpush1.msra.mxu0 %v157
        %185 = vmatprep.subr.mxu0 0.0
        %186 = vmatpush1.msra.mxu0 %v158
        %187 = vmatprep.subr.mxu0 0.0
        %188 = vmatpush1.msra.mxu0 %v159
        %189 = vmatprep.subr.mxu0 0.0
        %190 = vmatpush1.msra.mxu0 %v160
        %191 = vmatprep.subr.mxu0 0.0
        %192 = vmatpush1.msra.mxu0 %v161
        %193 = vmatprep.subr.mxu0 0.0
        %194 = vmatpush1.msra.mxu0 %v162
        %195 = vmatprep.subr.mxu0 0.0
        %196 = vmatpush1.msra.mxu0 %v163
        %197 = vmatprep.subr.mxu0 0.0
        %198 = vmatpush1.msra.mxu0 %v164
        %199 = vmatprep.subr.mxu0 0.0
        %200 = vmatpush1.msra.mxu0 %v165
        %201 = vmatprep.subr.mxu0 0.0
        %202 = vmatpush1.msra.mxu0 %v166
        %203 = vmatprep.subr.mxu0 0.0
        %204 = vmatpush1.msra.mxu0 %v167
        %205 = vmatprep.subr.mxu0 0.0
        %206 = vmatpush1.msra.mxu0 %v168
        %207 = vmatprep.subr.mxu0 0.0
        %208 = vmatpush1.msra.mxu0 %v169
        %209 = vmatprep.subr.mxu0 0.0
        %210 = vmatpush1.msra.mxu0 %v170
        %211 = vmatprep.subr.mxu0 0.0
        %212 = vmatpush1.msra.mxu0 0.0
        %213 = vmatprep.subr.mxu0 0.0
        %214 = vmatpush1.msra.mxu0 0.0
        %215 = vmatprep.subr.mxu0 0.0
        %216 = vmatpush1.msra.mxu0 0.0
        %217 = vmatprep.subr.mxu0 0.0
        %218 = vmatpush1.msra.mxu0 0.0
        %219 = vmatprep.subr.mxu0 0.0
        %220 = vmatpush1.msra.mxu0 0.0
        %221 = vmatprep.subr.mxu0 0.0
        %222 = vmatpush1.msra.mxu0 0.0
        %223 = vmatprep.subr.mxu0 0.0
        %224 = vmatpush1.msra.mxu0 0.0
        %225 = vmatprep.subr.mxu0 0.0
        %226 = vmatpush1.msra.mxu0 0.0
        %227 = vmatprep.subr.mxu0 0.0
        %228 = vmatpush1.msra.mxu0 0.0
        %229 = vmatprep.subr.mxu0 0.0
        %230 = vmatpush1.msra.mxu0 0.0
        %231 = vmatprep.subr.mxu0 0.0
        %232 = vmatpush1.msra.mxu0 0.0
        %233 = vmatprep.subr.mxu0 0.0
        %234 = vmatpush1.msra.mxu0 0.0
        %235 = vmatprep.subr.mxu0 0.0
        %236 = vmatpush1.msra.mxu0 0.0
        %237 = vmatprep.subr.mxu0 0.0
        %238 = vmatpush1.msra.mxu0 0.0
        %239 = vmatprep.subr.mxu0 0.0
        %240 = vmatpush1.msra.mxu0 0.0
        %241 = vmatprep.subr.mxu0 0.0
        %242 = vmatpush1.msra.mxu0 0.0
        %243 = vmatprep.mubr.f32.mxu0 0.0
        %244 = vmatmul.mubr.f32.gmra.mrb[0].mxu0 %v178
        %v245 = vpop.f32.mrb[0].mxu0
        %v246 = vadd.f32 0.0, %v245
        %v247 = vpop.f32.mrb[0].mxu0
        %248 = vdwg.mxu0
        %249 = vst [vmem:[%s149] sm:$0xff] %v246
        %s250 = sand.u32 %s72, 1
        %s251 = scalar_lea.sflag [#allocation4], %s250
        %s252 = sand.u32 %s72, 1
        %s253 = smul.addr %s252, 8
        %s254 = scalar_lea.vmem [#allocation5], %s253
        // Predicated region
        $region33: #{tpu_custom_call.1} parent=27 // pred_check
          %p255 = pneg %p82
        $region34: #{tpu_custom_call.1} parent=27 // pred_check_branch
          %257 = sbr.rel (%p255) target = $region36
        $region35: #{tpu_custom_call.1} parent=27 // pred_region
          %s259 = ssub.s32 128, 128
          %260 = vsyncadd %s251, %s259
          %s261 = smul.addr %s17, 128
          %s262 = scalar_lea.hbm %s2, %s261
          %s264 = sshll.u32 %s254, 4
          %s265 = int_to_ptr.vmem [resolvable:$true] %s264
          %267 = dma.vmem_to_hbm [thread:$0]  %s265, 128, %s262, %s251
        $region36: #{tpu_custom_call.1} parent=27 // pred_fallthru
          _
      $region28: #{tpu_custom_call.1} parent=5 // pred_fallthru
        _
      %p268 = scmp.le.s32.totalorder 2, %s12
      // Predicated region
      $region37: #{tpu_custom_call.1} parent=5 // pred_check
        %p269 = pneg %p268
      $region38: #{tpu_custom_call.1} parent=5 // pred_check_branch
        %271 = sbr.rel (%p269) target = $region40
      $region39: #{tpu_custom_call.1} parent=5 // pred_region
        %s272 = ssub.s32 %s12, 2
        // Predicated region
        $region41: #{tpu_custom_call.1} parent=39 // pred_check
          %p273 = pneg %p88
        $region42: #{tpu_custom_call.1} parent=39 // pred_check_branch
          %275 = sbr.rel (%p273) target = $region44
        $region43: #{tpu_custom_call.1} parent=39 // pred_region
          %s276 = sand.u32 %s73, 1
          %s277 = scalar_lea.sflag [#allocation4], %s276
          %s278 = sand.u32 %s73, 1
          %s279 = smul.addr %s278, 8
          %s280 = scalar_lea.vmem [#allocation5], %s279
          %281 = dma.done %s277, 128
        $region44: #{tpu_custom_call.1} parent=39 // pred_fallthru
          _
      $region40: #{tpu_custom_call.1} parent=5 // pred_fallthru
        _
    $region6: #{tpu_custom_call.1} parent=1 // loop_footer
      %s16 = sadd.s32 1, %s12
    $region7: #{tpu_custom_call.1} parent=1 // loop_footer_branch
      %11 = sbr.rel target = $region3
    $region8: #{tpu_custom_call.1} parent=1 // loop_exit
      _
    %282 = vsyncpa [#allocation3], 1
    %s283 = scalar_lea.sflag [#allocation3], 1
    %284 = vsyncpa %s283, 1
    %285 = vsyncpa [#allocation4], 1
    %s286 = scalar_lea.sflag [#allocation4], 1
    %287 = vsyncpa %s286, 1

</llo_original>
